<compile_context>
chip_gen: v6e
topology: v6e:2x2x1
jax: 0.10.0
libtpu: 0.0.40
codegen_flags: <defaults>
</compile_context>

<pallas_src>
import functools

import jax
import jax.numpy as jnp
from jax.experimental import pallas as pl
from jax.experimental.pallas import tpu as pltpu

LANES = 128
SUBLANES = 8
CHUNK_ROWS = 32                # rows folded per inner fori_loop step (4 f32 vregs / temp)
DEFAULT_ROWS_PER_TILE = 4096   # 2 MiB f32 per input per grid step
NUM_CORES = 2                  # leading "parallel" grid axis (v7x has 2 TCs/chip)


def _bce_terms(p, t):
    """Clamped-log BCE plus pos/neg masks (all float32), exactly as torch."""
    log_p = jnp.maximum(jnp.log(p), -100.0)
    log_1mp = jnp.maximum(jnp.log(1.0 - p), -100.0)
    bce = -(t * log_p + (1.0 - t) * log_1mp)
    pos = (t > 0.5).astype(jnp.float32)
    neg = (t < 0.5).astype(jnp.float32)
    return bce, pos, neg


def _wbce_kernel(p_ref, t_ref, acc_ref, *, n_tiles, tiles_per_core,
                 rows_per_tile, chunk_rows):
    """Accumulate vector partial sums for weighted BCE.

    acc_ref: (4, 8, 128) f32 output block (one per core), resident across the
    "arbitrary" grid axis:
      [0] sum(pos * bce)   [1] sum(neg * bce)   [2] sum(pos)   [3] sum(neg)
    """
    c = pl.program_id(0)   # core / parallel axis
    i = pl.program_id(1)   # tile index within this core's range

    @pl.when(i == 0)
    def _init():
        acc_ref[...] = jnp.zeros_like(acc_ref)

    # Cores with fewer tiles than tiles_per_core skip the extra (clamped) step.
    @pl.when(c * tiles_per_core + i < n_tiles)
    def _accumulate():
        n_chunks = rows_per_tile // chunk_rows

        def fold(x):
            # (chunk_rows, 128) -> (8, 128): pure vreg-wise VPU adds over the
            # sublane-group axis; no cross-lane/sublane reduction.
            return jnp.sum(
                x.reshape(chunk_rows // SUBLANES, SUBLANES, LANES), axis=0)

        def body(k, carry):
            pos_loss, neg_loss, pos_cnt, neg_cnt = carry
            r0 = pl.multiple_of(k * chunk_rows, chunk_rows)
            p = p_ref[pl.ds(r0, chunk_rows), :].astype(jnp.float32)
            t = t_ref[pl.ds(r0, chunk_rows), :].astype(jnp.float32)
            bce, pos, neg = _bce_terms(p, t)
            return (pos_loss + fold(pos * bce),
                    neg_loss + fold(neg * bce),
                    pos_cnt + fold(pos),
                    neg_cnt + fold(neg))

        zero = jnp.zeros((SUBLANES, LANES), jnp.float32)
        pos_loss, neg_loss, pos_cnt, neg_cnt = jax.lax.fori_loop(
            0, n_chunks, body, (zero, zero, zero, zero),
            unroll=max(1, min(n_chunks, 4)))

        acc_ref[0] += pos_loss
        acc_ref[1] += neg_loss
        acc_ref[2] += pos_cnt
        acc_ref[3] += neg_cnt


@jax.jit
def weighted_bce(logit_pixel, truth_pixel, w_pos=0.5, w_neg=0.5):
    # Flatten exactly like .view(-1) (row-major) — metadata only.
    logit = jnp.reshape(logit_pixel, (-1,))
    truth = jnp.reshape(truth_pixel, (-1,))
    assert logit.shape == truth.shape
    n = logit.shape[0]

    rows = n // LANES                     # full 128-lane rows
    rows_per_tile = min(DEFAULT_ROWS_PER_TILE, (rows // CHUNK_ROWS) * CHUNK_ROWS)
    n_tiles = rows // rows_per_tile if rows_per_tile else 0
    kernel_rows = n_tiles * rows_per_tile
    kernel_elems = kernel_rows * LANES

    pos_loss = neg_loss = pos_cnt = neg_cnt = jnp.float32(0.0)

    if n_tiles > 0:
        if kernel_elems == n:
            # Contiguous row-major reshape: free bitcast, no HBM copy.
            logit_2d = logit.reshape(kernel_rows, LANES)
            truth_2d = truth.reshape(kernel_rows, LANES)
        else:
            # Rare ragged case: one prefix-slice copy of the 128*tile-aligned
            # part (still cheaper than padding the whole array).
            logit_2d = jax.lax.slice(logit, (0,), (kernel_elems,)).reshape(
                kernel_rows, LANES)
            truth_2d = jax.lax.slice(truth, (0,), (kernel_elems,)).reshape(
                kernel_rows, LANES)

        tiles_per_core = (n_tiles + NUM_CORES - 1) // NUM_CORES

        def in_map(c, i):
            # Clamp so the (at most one) surplus step of the last core never
            # DMAs out of bounds; its compute is skipped by pl.when.
            return (jnp.minimum(c * tiles_per_core + i, n_tiles - 1), 0)

        kernel = functools.partial(
            _wbce_kernel, n_tiles=n_tiles, tiles_per_core=tiles_per_core,
            rows_per_tile=rows_per_tile, chunk_rows=CHUNK_ROWS)

        partials = pl.pallas_call(
            kernel,
            out_shape=jax.ShapeDtypeStruct(
                (NUM_CORES, 4, SUBLANES, LANES), jnp.float32),
            grid_spec=pltpu.PrefetchScalarGridSpec(
                num_scalar_prefetch=0,
                grid=(NUM_CORES, tiles_per_core),
                in_specs=[
                    pl.BlockSpec((rows_per_tile, LANES), in_map),
                    pl.BlockSpec((rows_per_tile, LANES), in_map),
                ],
                # One lane-dense accumulator block per core, resident across
                # the whole "arbitrary" axis; written back to HBM once.
                out_specs=pl.BlockSpec((None, 4, SUBLANES, LANES),
                                       lambda c, i: (c, 0, 0, 0)),
            ),
            compiler_params=pltpu.CompilerParams(
                dimension_semantics=("parallel", "arbitrary"),
                vmem_limit_bytes=32 * 1024 * 1024,
            ),
        )(logit_2d, truth_2d)

        pos_loss = jnp.sum(partials[:, 0])
        neg_loss = jnp.sum(partials[:, 1])
        pos_cnt = jnp.sum(partials[:, 2])
        neg_cnt = jnp.sum(partials[:, 3])

    if kernel_elems < n:
        # Tail: leftover rows (< rows_per_tile) plus the <128-lane remainder.
        # Tiny relative to the streamed bulk; plain XLA is fine here.
        p_tail = logit[kernel_elems:].astype(jnp.float32)
        t_tail = truth[kernel_elems:].astype(jnp.float32)
        bce, pos, neg = _bce_terms(p_tail, t_tail)
        pos_loss = pos_loss + jnp.sum(pos * bce)
        neg_loss = neg_loss + jnp.sum(neg * bce)
        pos_cnt = pos_cnt + jnp.sum(pos)
        neg_cnt = neg_cnt + jnp.sum(neg)

    # TODO(synk): torch's .item() host-sync on pos/neg counts has no in-graph
    # equivalent; the counts stay as traced values (numerically identical).
    return (w_pos * pos_loss / (pos_cnt + 1e-12)
            + w_neg * neg_loss / (neg_cnt + 1e-12))


def _reference(logit_pixel, truth_pixel, w_pos=0.5, w_neg=0.5):
    logit = jnp.reshape(logit_pixel, (-1,)).astype(jnp.float32)
    truth = jnp.reshape(truth_pixel, (-1,)).astype(jnp.float32)
    bce, pos, neg = _bce_terms(logit, truth)
    pos_weight = pos.sum() + 1e-12
    neg_weight = neg.sum() + 1e-12
    return (w_pos * pos * bce / pos_weight + w_neg * neg * bce / neg_weight).sum()


if __name__ == "__main__":
    key = jax.random.PRNGKey(0)

    # Case 1: 128-aligned size (2*4*32*32 = 8192 elems -> pure kernel path).
    k1, k2, k3, k4 = jax.random.split(key, 4)
    shape1 = (2, 4, 32, 32)
    logit1 = jax.nn.sigmoid(jax.random.normal(k1, shape1, jnp.float32))
    truth1 = (jax.random.uniform(k2, shape1) > 0.5).astype(jnp.float32)
    out1 = jax.block_until_ready(weighted_bce(logit1, truth1))
    ref1 = _reference(logit1, truth1)
    assert jnp.allclose(out1, ref1, rtol=1e-5, atol=1e-5), (out1, ref1)

    # Case 2: kernel tiles + wrapper tail (2*4*40*40 = 12800 elems).
    shape2 = (2, 4, 40, 40)
    logit2 = jax.nn.sigmoid(jax.random.normal(k3, shape2, jnp.float32))
    truth2 = (jax.random.uniform(k4, shape2) > 0.5).astype(jnp.float32)
    out2 = jax.block_until_ready(weighted_bce(logit2, truth2))
    ref2 = _reference(logit2, truth2)
    assert jnp.allclose(out2, ref2, rtol=1e-5, atol=1e-5), (out2, ref2)

    print("KERNEL_OK")
</pallas_src>

<mosaic_0001>
module attributes {stable_mosaic.version = 11 : i64} {
  func.func @_wbce_kernel(%arg0: i32, %arg1: i32, %arg2: memref<64x128xf32, #tpu.memory_space<vmem>>, %arg3: memref<64x128xf32, #tpu.memory_space<vmem>>, %arg4: memref<1x4x8x128xf32, #tpu.memory_space<vmem>>) attributes {dimension_semantics = [#tpu.dimension_semantics<parallel>, #tpu.dimension_semantics<arbitrary>], iteration_bounds = array<i64: 2, 1>, scalar_prefetch = 0 : i64, scratch_operands = 0 : i64, tpu.core_type = #tpu.core_type<tc>, window_params = [{transform_indices = @transform_0, window_bounds = array<i64: 64, 128>}, {transform_indices = @transform_1, window_bounds = array<i64: 64, 128>}, {transform_indices = @transform_2, window_bounds = array<i64: 1, 4, 8, 128>}]} {
    %c0_i32 = arith.constant 0 : i32
    %0 = arith.cmpi eq, %arg1, %c0_i32 : i32
    %1 = arith.extui %0 : i1 to i32
    %c0_i32_0 = arith.constant 0 : i32
    %2 = arith.cmpi ne, %1, %c0_i32_0 : i32
    scf.if %2 {
      %cst = arith.constant 0.000000e+00 : f32
      %8 = vector.broadcast %cst : f32 to vector<4x8x128xf32>
      %c0 = arith.constant 0 : index
      %c0_3 = arith.constant 0 : index
      %c0_4 = arith.constant 0 : index
      %c0_5 = arith.constant 0 : index
      %9 = vector.load %arg4[%c0, %c0_3, %c0_4, %c0_5] : memref<1x4x8x128xf32, #tpu.memory_space<vmem>>, vector<1x4x8x128xf32>
      %10 = vector.shape_cast %9 : vector<1x4x8x128xf32> to vector<4x8x128xf32>
      %11 = vector.shape_cast %8 : vector<4x8x128xf32> to vector<1x4x8x128xf32>
      tpu.vector_store %arg4[%c0, %c0_3, %c0_4, %c0_5], %11 {strides = array<i32>} : memref<1x4x8x128xf32, #tpu.memory_space<vmem>>, vector<1x4x8x128xf32>,
    } else {
    }
    %c1_i32 = arith.constant 1 : i32
    %3 = arith.muli %arg0, %c1_i32 : i32
    %4 = arith.addi %3, %arg1 : i32
    %c1_i32_1 = arith.constant 1 : i32
    %5 = arith.cmpi slt, %4, %c1_i32_1 : i32
    %6 = arith.extui %5 : i1 to i32
    %c0_i32_2 = arith.constant 0 : i32
    %7 = arith.cmpi ne, %6, %c0_i32_2 : i32
    scf.if %7 {
      %cst = arith.constant 0.000000e+00 : f32
      %8 = vector.broadcast %cst : f32 to vector<8x128xf32>
      %c0_i32_3 = arith.constant 0 : i32
      %c32_i32 = arith.constant 32 : i32
      %9 = arith.muli %c0_i32_3, %c32_i32 : i32
      %10 = tpu.assume_multiple %9, 32 : i32
      %11 = arith.index_cast %10 : i32 to index
      %c0 = arith.constant 0 : index
      %12 = vector.load %arg2[%11, %c0] : memref<64x128xf32, #tpu.memory_space<vmem>>, vector<32x128xf32>
      %13 = arith.index_cast %10 : i32 to index
      %c0_4 = arith.constant 0 : index
      %14 = vector.load %arg3[%13, %c0_4] : memref<64x128xf32, #tpu.memory_space<vmem>>, vector<32x128xf32>
      %15 = math.log %12 : vector<32x128xf32>
      %cst_5 = arith.constant -1.000000e+02 : f32
      %16 = vector.broadcast %cst_5 : f32 to vector<32x128xf32>
      %17 = arith.maximumf %15, %16 : vector<32x128xf32>
      %cst_6 = arith.constant 1.000000e+00 : f32
      %18 = vector.broadcast %cst_6 : f32 to vector<32x128xf32>
      %19 = arith.subf %18, %12 : vector<32x128xf32>
      %20 = math.log %19 : vector<32x128xf32>
      %cst_7 = arith.constant -1.000000e+02 : f32
      %21 = vector.broadcast %cst_7 : f32 to vector<32x128xf32>
      %22 = arith.maximumf %20, %21 : vector<32x128xf32>
      %23 = arith.mulf %14, %17 : vector<32x128xf32>
      %cst_8 = arith.constant 1.000000e+00 : f32
      %24 = vector.broadcast %cst_8 : f32 to vector<32x128xf32>
      %25 = arith.subf %24, %14 : vector<32x128xf32>
      %26 = arith.mulf %25, %22 : vector<32x128xf32>
      %27 = arith.addf %23, %26 : vector<32x128xf32>
      %cst_9 = arith.constant 0.000000e+00 : f32
      %28 = vector.broadcast %cst_9 : f32 to vector<32x128xf32>
      %29 = arith.subf %28, %27 : vector<32x128xf32>
      %cst_10 = arith.constant 5.000000e-01 : f32
      %30 = vector.broadcast %cst_10 : f32 to vector<32x128xf32>
      %31 = arith.cmpf ogt, %14, %30 : vector<32x128xf32>
      %32 = arith.extui %31 : vector<32x128xi1> to vector<32x128xi32>
      %33 = arith.sitofp %32 : vector<32x128xi32> to vector<32x128xf32>
      %cst_11 = arith.constant 5.000000e-01 : f32
      %34 = vector.broadcast %cst_11 : f32 to vector<32x128xf32>
      %35 = arith.cmpf olt, %14, %34 : vector<32x128xf32>
      %36 = arith.extui %35 : vector<32x128xi1> to vector<32x128xi32>
      %37 = arith.sitofp %36 : vector<32x128xi32> to vector<32x128xf32>
      %38 = arith.mulf %33, %29 : vector<32x128xf32>
      %39 = vector.shape_cast %38 : vector<32x128xf32> to vector<4x8x128xf32>
      %cst_12 = arith.constant dense<0.000000e+00> : vector<8x128xf32>
      %40 = vector.multi_reduction <add>, %39, %cst_12 [0] : vector<4x8x128xf32> to vector<8x128xf32>
      %41 = arith.addf %8, %40 : vector<8x128xf32>
      %42 = arith.mulf %37, %29 : vector<32x128xf32>
      %43 = vector.shape_cast %42 : vector<32x128xf32> to vector<4x8x128xf32>
      %cst_13 = arith.constant dense<0.000000e+00> : vector<8x128xf32>
      %44 = vector.multi_reduction <add>, %43, %cst_13 [0] : vector<4x8x128xf32> to vector<8x128xf32>
      %45 = arith.addf %8, %44 : vector<8x128xf32>
      %46 = vector.shape_cast %33 : vector<32x128xf32> to vector<4x8x128xf32>
      %cst_14 = arith.constant dense<0.000000e+00> : vector<8x128xf32>
      %47 = vector.multi_reduction <add>, %46, %cst_14 [0] : vector<4x8x128xf32> to vector<8x128xf32>
      %48 = arith.addf %8, %47 : vector<8x128xf32>
      %49 = vector.shape_cast %37 : vector<32x128xf32> to vector<4x8x128xf32>
      %cst_15 = arith.constant dense<0.000000e+00> : vector<8x128xf32>
      %50 = vector.multi_reduction <add>, %49, %cst_15 [0] : vector<4x8x128xf32> to vector<8x128xf32>
      %51 = arith.addf %8, %50 : vector<8x128xf32>
      %c1_i32_16 = arith.constant 1 : i32
      %c32_i32_17 = arith.constant 32 : i32
      %52 = arith.muli %c1_i32_16, %c32_i32_17 : i32
      %53 = tpu.assume_multiple %52, 32 : i32
      %54 = arith.index_cast %53 : i32 to index
      %c0_18 = arith.constant 0 : index
      %55 = vector.load %arg2[%54, %c0_18] : memref<64x128xf32, #tpu.memory_space<vmem>>, vector<32x128xf32>
      %56 = arith.index_cast %53 : i32 to index
      %c0_19 = arith.constant 0 : index
      %57 = vector.load %arg3[%56, %c0_19] : memref<64x128xf32, #tpu.memory_space<vmem>>, vector<32x128xf32>
      %58 = math.log %55 : vector<32x128xf32>
      %cst_20 = arith.constant -1.000000e+02 : f32
      %59 = vector.broadcast %cst_20 : f32 to vector<32x128xf32>
      %60 = arith.maximumf %58, %59 : vector<32x128xf32>
      %cst_21 = arith.constant 1.000000e+00 : f32
      %61 = vector.broadcast %cst_21 : f32 to vector<32x128xf32>
      %62 = arith.subf %61, %55 : vector<32x128xf32>
      %63 = math.log %62 : vector<32x128xf32>
      %cst_22 = arith.constant -1.000000e+02 : f32
      %64 = vector.broadcast %cst_22 : f32 to vector<32x128xf32>
      %65 = arith.maximumf %63, %64 : vector<32x128xf32>
      %66 = arith.mulf %57, %60 : vector<32x128xf32>
      %cst_23 = arith.constant 1.000000e+00 : f32
      %67 = vector.broadcast %cst_23 : f32 to vector<32x128xf32>
      %68 = arith.subf %67, %57 : vector<32x128xf32>
      %69 = arith.mulf %68, %65 : vector<32x128xf32>
      %70 = arith.addf %66, %69 : vector<32x128xf32>
      %cst_24 = arith.constant 0.000000e+00 : f32
      %71 = vector.broadcast %cst_24 : f32 to vector<32x128xf32>
      %72 = arith.subf %71, %70 : vector<32x128xf32>
      %cst_25 = arith.constant 5.000000e-01 : f32
      %73 = vector.broadcast %cst_25 : f32 to vector<32x128xf32>
      %74 = arith.cmpf ogt, %57, %73 : vector<32x128xf32>
      %75 = arith.extui %74 : vector<32x128xi1> to vector<32x128xi32>
      %76 = arith.sitofp %75 : vector<32x128xi32> to vector<32x128xf32>
      %cst_26 = arith.constant 5.000000e-01 : f32
      %77 = vector.broadcast %cst_26 : f32 to vector<32x128xf32>
      %78 = arith.cmpf olt, %57, %77 : vector<32x128xf32>
      %79 = arith.extui %78 : vector<32x128xi1> to vector<32x128xi32>
      %80 = arith.sitofp %79 : vector<32x128xi32> to vector<32x128xf32>
      %81 = arith.mulf %76, %72 : vector<32x128xf32>
      %82 = vector.shape_cast %81 : vector<32x128xf32> to vector<4x8x128xf32>
      %cst_27 = arith.constant dense<0.000000e+00> : vector<8x128xf32>
      %83 = vector.multi_reduction <add>, %82, %cst_27 [0] : vector<4x8x128xf32> to vector<8x128xf32>
      %84 = arith.addf %41, %83 : vector<8x128xf32>
      %85 = arith.mulf %80, %72 : vector<32x128xf32>
      %86 = vector.shape_cast %85 : vector<32x128xf32> to vector<4x8x128xf32>
      %cst_28 = arith.constant dense<0.000000e+00> : vector<8x128xf32>
      %87 = vector.multi_reduction <add>, %86, %cst_28 [0] : vector<4x8x128xf32> to vector<8x128xf32>
      %88 = arith.addf %45, %87 : vector<8x128xf32>
      %89 = vector.shape_cast %76 : vector<32x128xf32> to vector<4x8x128xf32>
      %cst_29 = arith.constant dense<0.000000e+00> : vector<8x128xf32>
      %90 = vector.multi_reduction <add>, %89, %cst_29 [0] : vector<4x8x128xf32> to vector<8x128xf32>
      %91 = arith.addf %48, %90 : vector<8x128xf32>
      %92 = vector.shape_cast %80 : vector<32x128xf32> to vector<4x8x128xf32>
      %cst_30 = arith.constant dense<0.000000e+00> : vector<8x128xf32>
      %93 = vector.multi_reduction <add>, %92, %cst_30 [0] : vector<4x8x128xf32> to vector<8x128xf32>
      %94 = arith.addf %51, %93 : vector<8x128xf32>
      %c2_i32 = arith.constant 2 : i32
      %c0_31 = arith.constant 0 : index
      %c0_32 = arith.constant 0 : index
      %c0_33 = arith.constant 0 : index
      %c0_34 = arith.constant 0 : index
      %95 = vector.load %arg4[%c0_31, %c0_32, %c0_33, %c0_34] : memref<1x4x8x128xf32, #tpu.memory_space<vmem>>, vector<1x1x8x128xf32>
      %96 = vector.shape_cast %95 : vector<1x1x8x128xf32> to vector<8x128xf32>
      %97 = arith.addf %96, %84 : vector<8x128xf32>
      %c0_35 = arith.constant 0 : index
      %c0_36 = arith.constant 0 : index
      %c0_37 = arith.constant 0 : index
      %c0_38 = arith.constant 0 : index
      %98 = vector.load %arg4[%c0_35, %c0_36, %c0_37, %c0_38] : memref<1x4x8x128xf32, #tpu.memory_space<vmem>>, vector<1x1x8x128xf32>
      %99 = vector.shape_cast %98 : vector<1x1x8x128xf32> to vector<8x128xf32>
      %100 = vector.shape_cast %97 : vector<8x128xf32> to vector<1x1x8x128xf32>
      tpu.vector_store %arg4[%c0_35, %c0_36, %c0_37, %c0_38], %100 {strides = array<i32>} : memref<1x4x8x128xf32, #tpu.memory_space<vmem>>, vector<1x1x8x128xf32>,
      %c0_39 = arith.constant 0 : index
      %c1 = arith.constant 1 : index
      %c0_40 = arith.constant 0 : index
      %c0_41 = arith.constant 0 : index
      %101 = vector.load %arg4[%c0_39, %c1, %c0_40, %c0_41] : memref<1x4x8x128xf32, #tpu.memory_space<vmem>>, vector<1x1x8x128xf32>
      %102 = vector.shape_cast %101 : vector<1x1x8x128xf32> to vector<8x128xf32>
      %103 = arith.addf %102, %88 : vector<8x128xf32>
      %c0_42 = arith.constant 0 : index
      %c1_43 = arith.constant 1 : index
      %c0_44 = arith.constant 0 : index
      %c0_45 = arith.constant 0 : index
      %104 = vector.load %arg4[%c0_42, %c1_43, %c0_44, %c0_45] : memref<1x4x8x128xf32, #tpu.memory_space<vmem>>, vector<1x1x8x128xf32>
      %105 = vector.shape_cast %104 : vector<1x1x8x128xf32> to vector<8x128xf32>
      %106 = vector.shape_cast %103 : vector<8x128xf32> to vector<1x1x8x128xf32>
      tpu.vector_store %arg4[%c0_42, %c1_43, %c0_44, %c0_45], %106 {strides = array<i32>} : memref<1x4x8x128xf32, #tpu.memory_space<vmem>>, vector<1x1x8x128xf32>,
      %c0_46 = arith.constant 0 : index
      %c2 = arith.constant 2 : index
      %c0_47 = arith.constant 0 : index
      %c0_48 = arith.constant 0 : index
      %107 = vector.load %arg4[%c0_46, %c2, %c0_47, %c0_48] : memref<1x4x8x128xf32, #tpu.memory_space<vmem>>, vector<1x1x8x128xf32>
      %108 = vector.shape_cast %107 : vector<1x1x8x128xf32> to vector<8x128xf32>
      %109 = arith.addf %108, %91 : vector<8x128xf32>
      %c0_49 = arith.constant 0 : index
      %c2_50 = arith.constant 2 : index
      %c0_51 = arith.constant 0 : index
      %c0_52 = arith.constant 0 : index
      %110 = vector.load %arg4[%c0_49, %c2_50, %c0_51, %c0_52] : memref<1x4x8x128xf32, #tpu.memory_space<vmem>>, vector<1x1x8x128xf32>
      %111 = vector.shape_cast %110 : vector<1x1x8x128xf32> to vector<8x128xf32>
      %112 = vector.shape_cast %109 : vector<8x128xf32> to vector<1x1x8x128xf32>
      tpu.vector_store %arg4[%c0_49, %c2_50, %c0_51, %c0_52], %112 {strides = array<i32>} : memref<1x4x8x128xf32, #tpu.memory_space<vmem>>, vector<1x1x8x128xf32>,
      %c0_53 = arith.constant 0 : index
      %c3 = arith.constant 3 : index
      %c0_54 = arith.constant 0 : index
      %c0_55 = arith.constant 0 : index
      %113 = vector.load %arg4[%c0_53, %c3, %c0_54, %c0_55] : memref<1x4x8x128xf32, #tpu.memory_space<vmem>>, vector<1x1x8x128xf32>
      %114 = vector.shape_cast %113 : vector<1x1x8x128xf32> to vector<8x128xf32>
      %115 = arith.addf %114, %94 : vector<8x128xf32>
      %c0_56 = arith.constant 0 : index
      %c3_57 = arith.constant 3 : index
      %c0_58 = arith.constant 0 : index
      %c0_59 = arith.constant 0 : index
      %116 = vector.load %arg4[%c0_56, %c3_57, %c0_58, %c0_59] : memref<1x4x8x128xf32, #tpu.memory_space<vmem>>, vector<1x1x8x128xf32>
      %117 = vector.shape_cast %116 : vector<1x1x8x128xf32> to vector<8x128xf32>
      %118 = vector.shape_cast %115 : vector<8x128xf32> to vector<1x1x8x128xf32>
      tpu.vector_store %arg4[%c0_56, %c3_57, %c0_58, %c0_59], %118 {strides = array<i32>} : memref<1x4x8x128xf32, #tpu.memory_space<vmem>>, vector<1x1x8x128xf32>,
    } else {
    }
    return
  }
  func.func @transform_0(%arg0: i32, %arg1: i32) -> (i32, i32) {
    %c1_i32 = arith.constant 1 : i32
    %0 = arith.muli %arg0, %c1_i32 : i32
    %1 = arith.addi %0, %arg1 : i32
    %c0_i32 = arith.constant 0 : i32
    %2 = arith.minsi %1, %c0_i32 : i32
    %c0_i32_0 = arith.constant 0 : i32
    %c0_i32_1 = arith.constant 0 : i32
    return %2, %c0_i32_0 : i32, i32
  }
  func.func @transform_1(%arg0: i32, %arg1: i32) -> (i32, i32) {
    %c1_i32 = arith.constant 1 : i32
    %0 = arith.muli %arg0, %c1_i32 : i32
    %1 = arith.addi %0, %arg1 : i32
    %c0_i32 = arith.constant 0 : i32
    %2 = arith.minsi %1, %c0_i32 : i32
    %c0_i32_0 = arith.constant 0 : i32
    %c0_i32_1 = arith.constant 0 : i32
    return %2, %c0_i32_0 : i32, i32
  }
  func.func @transform_2(%arg0: i32, %arg1: i32) -> (i32, i32, i32, i32) {
    %c0_i32 = arith.constant 0 : i32
    %c0_i32_0 = arith.constant 0 : i32
    %c0_i32_1 = arith.constant 0 : i32
    %c0_i32_2 = arith.constant 0 : i32
    return %arg0, %c0_i32, %c0_i32_0, %c0_i32_1 : i32, i32, i32, i32
  }
}

</mosaic_0001>

<llo_original>
// kernel: weighted_bce.1
$region0: #{weighted_bce.1}
  #allocation0 [shape = 'u32[]', space=smem, size = 0x4, offset = 0x4, fixed_abs, tag = 'smem constant byte address 0x4 - core index']
  #allocation1 [shape = 'u32[144,128]{1,0:T(1,128)}', space=vmem, size = 0x12000, scoped, tag = 'internal scratch']
  %s0 = inlined_call_operand.vmem [shape: f32[64,128], index: 0, kind: input, shape index: {}]
  %s1 = inlined_call_operand.vmem [shape: f32[64,128], index: 1, kind: input, shape index: {}]
  %s2 = inlined_call_operand.vmem [shape: f32[2,4,8,128], index: 2, kind: output, shape index: {}]
  %s3 = sld [smem:[#allocation0]]
  $region49: #{weighted_bce.1} parent=0
    _
  %s5 = ssub.s32 1, %s3
  %s6 = scalar_select 0, %s5, %s3
  loop: start=0, step=1, limit=4
  $region2: #{weighted_bce.1} parent=0 // loop_pre_header
    _
  $region3: #{weighted_bce.1} parent=0 // loop_header
    %s8 = sphi 0, %s12
    %p9 = scmp.ge.s32.totalorder %s8, 4
    %s15 = sphi 0, %s27
    %s16 = sphi 0, %s23
    %s17 = sphi 0, %s15
    %s18 = sphi 0, %s16
    %s19 = sphi 0, %s17
    %s20 = sphi 0, %s18
    %s36 = sphi 0, %s38
    %s39 = sphi 0, %s36
    %s40 = sphi 0, %s39
    %s56 = sphi 0, %s40
    %s68 = sphi 0, %s70
    %s71 = sphi 0, %s68
    %s72 = sphi 0, %s71
    %s88 = sphi 0, %s72
    %s94 = sphi 0, %s96
    %s97 = sphi 0, %s94
    %s98 = sphi 0, %s97
    %s114 = sphi 0, %s98
  $region4: #{weighted_bce.1} parent=0 // loop_header_branch
    %11 = sbr.rel (%p9) target = $region8
  $region5: #{weighted_bce.1} parent=0 // loop_body
    %s13 = ssub.s32 %s8, 1
    %s14 = ssub.s32 %s8, 2
    %s21 = sadd.s32 1, %s16
    %p22 = scmp.ge.s32.totalorder %s21, 1
    %s23 = scalar_select %p22, 0, %s21
    %s24 = sadd.s32 1, %s15
    %s25 = scalar_select %p22, %s24, %s15
    %p26 = scmp.ge.s32.totalorder %s25, 2
    %s27 = scalar_select %p26, 0, %s25
    %s28 = sadd.s32 %s15, %s16
    %p29 = scmp.lt.s32.totalorder %s28, 0
    %s30 = scalar_select %p29, %s28, 0
    %s31 = sadd.s32 %s27, %s23
    %p32 = scmp.lt.s32.totalorder %s31, 0
    %s33 = scalar_select %p32, %s31, 0
    %s34 = ssub.s32 %s30, %s33
    %p35 = scmp.eq.s32.totalorder %s34, 0
    %s37 = sadd.s32 %s36, 1
    %s38 = scalar_select %p35, %s36, %s37
    %p41 = pneg %p35
    %p42 = scmp.eq.s32.totalorder %s8, 1
    %p43 = por %p41, %p42
    %p44 = scmp.ne.s32.totalorder %s36, %s39
    %p45 = scmp.eq.s32.totalorder %s8, 0
    %p46 = por %p44, %p45
    %p47 = scmp.ne.s32.totalorder %s36, %s39
    %p48 = scmp.eq.s32.totalorder %s13, 1
    %p49 = por %p47, %p48
    %p50 = scmp.ne.s32.totalorder %s39, %s40
    %p51 = scmp.eq.s32.totalorder %s13, 0
    %p52 = por %p50, %p51
    %p53 = scmp.ne.s32.totalorder %s39, %s40
    %p54 = scmp.eq.s32.totalorder %s14, 1
    %p55 = por %p53, %p54
    %p57 = scmp.ne.s32.totalorder %s40, %s56
    %p58 = scmp.eq.s32.totalorder %s14, 0
    %p59 = por %p57, %p58
    %s60 = sadd.s32 %s15, %s16
    %p61 = scmp.lt.s32.totalorder %s60, 0
    %s62 = scalar_select %p61, %s60, 0
    %s63 = sadd.s32 %s27, %s23
    %p64 = scmp.lt.s32.totalorder %s63, 0
    %s65 = scalar_select %p64, %s63, 0
    %s66 = ssub.s32 %s62, %s65
    %p67 = scmp.eq.s32.totalorder %s66, 0
    %s69 = sadd.s32 %s68, 1
    %s70 = scalar_select %p67, %s68, %s69
    %p73 = pneg %p67
    %p74 = scmp.eq.s32.totalorder %s8, 1
    %p75 = por %p73, %p74
    %p76 = scmp.ne.s32.totalorder %s68, %s71
    %p77 = scmp.eq.s32.totalorder %s8, 0
    %p78 = por %p76, %p77
    %p79 = scmp.ne.s32.totalorder %s68, %s71
    %p80 = scmp.eq.s32.totalorder %s13, 1
    %p81 = por %p79, %p80
    %p82 = scmp.ne.s32.totalorder %s71, %s72
    %p83 = scmp.eq.s32.totalorder %s13, 0
    %p84 = por %p82, %p83
    %p85 = scmp.ne.s32.totalorder %s71, %s72
    %p86 = scmp.eq.s32.totalorder %s14, 1
    %p87 = por %p85, %p86
    %p89 = scmp.ne.s32.totalorder %s72, %s88
    %p90 = scmp.eq.s32.totalorder %s14, 0
    %p91 = por %p89, %p90
    %s92 = ssub.s32 %s15, %s27
    %p93 = scmp.eq.s32.totalorder %s92, 0
    %s95 = sadd.s32 %s94, 1
    %s96 = scalar_select %p93, %s94, %s95
    %p99 = pneg %p93
    %p100 = scmp.eq.s32.totalorder %s8, 1
    %p101 = por %p99, %p100
    %p102 = scmp.ne.s32.totalorder %s94, %s97
    %p103 = scmp.eq.s32.totalorder %s8, 0
    %p104 = por %p102, %p103
    %p105 = scmp.ne.s32.totalorder %s94, %s97
    %p106 = scmp.eq.s32.totalorder %s13, 1
    %p107 = por %p105, %p106
    %p108 = scmp.ne.s32.totalorder %s97, %s98
    %p109 = scmp.eq.s32.totalorder %s13, 0
    %p110 = por %p108, %p109
    %p111 = scmp.ne.s32.totalorder %s97, %s98
    %p112 = scmp.eq.s32.totalorder %s14, 1
    %p113 = por %p111, %p112
    %p115 = scmp.ne.s32.totalorder %s98, %s114
    %p116 = scmp.eq.s32.totalorder %s14, 0
    %p117 = por %p115, %p116
    %p118 = scmp.le.s32.totalorder 1, %s8
    %p119 = scmp.lt.s32.totalorder %s8, 3
    %p120 = pnand %p118, %p119
    %p121 = pneg %p120
    // Predicated region
    $region9: #{weighted_bce.1} parent=5 // pred_check
      _
    $region10: #{weighted_bce.1} parent=5 // pred_check_branch
      %123 = sbr.rel (%p120) target = $region12
    $region11: #{weighted_bce.1} parent=5 // pred_region
      %s124 = ssub.s32 %s8, 1
    $region12: #{weighted_bce.1} parent=5 // pred_fallthru
      _
    %p125 = scmp.lt.s32.totalorder %s8, 2
    // Predicated region
    $region13: #{weighted_bce.1} parent=5 // pred_check
      %p126 = pneg %p125
    $region14: #{weighted_bce.1} parent=5 // pred_check_branch
      %128 = sbr.rel (%p126) target = $region16
    $region15: #{weighted_bce.1} parent=5 // pred_region
      // Predicated region
      $region17: #{weighted_bce.1} parent=15 // pred_check
        %p129 = pneg %p46
      $region18: #{weighted_bce.1} parent=15 // pred_check_branch
        %131 = sbr.rel (%p129) target = $region20
      $region19: #{weighted_bce.1} parent=15 // pred_region
        %s132 = sadd.s32 %s15, %s16
        %p133 = scmp.lt.s32.totalorder %s132, 0
        %s134 = scalar_select %p133, %s132, 0
        %s135 = smul.u32 8, %s134
        %p136 = scmp.lt.s32.totalorder %s135, 7
        %s137 = scalar_select %p136, %s135, 7
        %s138 = smul.addr %s137, 8
        %s139 = scalar_lea.vmem %s0, %s138
        %s140 = sadd.s32 %s15, %s16
        %p141 = scmp.lt.s32.totalorder %s140, 0
        %s142 = scalar_select %p141, %s140, 0
        %s143 = smul.u32 8, %s142
      $region20: #{weighted_bce.1} parent=15 // pred_fallthru
        _
      // Predicated region
      $region21: #{weighted_bce.1} parent=15 // pred_check
        %p144 = pneg %p78
      $region22: #{weighted_bce.1} parent=15 // pred_check_branch
        %146 = sbr.rel (%p144) target = $region24
      $region23: #{weighted_bce.1} parent=15 // pred_region
        %s147 = sadd.s32 %s15, %s16
        %p148 = scmp.lt.s32.totalorder %s147, 0
        %s149 = scalar_select %p148, %s147, 0
        %s150 = smul.u32 8, %s149
        %p151 = scmp.lt.s32.totalorder %s150, 7
        %s152 = scalar_select %p151, %s150, 7
        %s153 = smul.addr %s152, 8
        %s154 = scalar_lea.vmem %s1, %s153
        %s155 = sadd.s32 %s15, %s16
        %p156 = scmp.lt.s32.totalorder %s155, 0
        %s157 = scalar_select %p156, %s155, 0
        %s158 = smul.u32 8, %s157
      $region24: #{weighted_bce.1} parent=15 // pred_fallthru
        _
    $region16: #{weighted_bce.1} parent=5 // pred_fallthru
      _
    %p159 = scmp.le.s32.totalorder 1, %s8
    %p160 = scmp.lt.s32.totalorder %s8, 3
    %p161 = pnand %p159, %p160
    %p162 = pneg %p161
    // Predicated region
    $region25: #{weighted_bce.1} parent=5 // pred_check
      _
    $region26: #{weighted_bce.1} parent=5 // pred_check_branch
      %164 = sbr.rel (%p161) target = $region28
    $region27: #{weighted_bce.1} parent=5 // pred_region
      %s165 = ssub.s32 %s8, 1
      %s166 = sadd.s32 %s17, %s18
      %p167 = scmp.lt.s32.totalorder %s166, 0
      %s168 = scalar_select %p167, %s166, 0
      %s169 = smul.u32 8, %s168
      %p170 = scmp.lt.s32.totalorder %s169, 7
      %s171 = scalar_select %p170, %s169, 7
      %s172 = smul.addr %s171, 8
      %s173 = scalar_lea.vmem %s0, %s172
      %p174 = pneg %p52
      %p175 = pneg %p49
      %s176 = sadd.s32 %s17, %s18
      %p177 = scmp.lt.s32.totalorder %s176, 0
      %s178 = scalar_select %p177, %s176, 0
      %s179 = smul.u32 8, %s178
      %p180 = scmp.lt.s32.totalorder %s179, 7
      %s181 = scalar_select %p180, %s179, 7
      %s182 = smul.addr %s181, 8
      %s183 = scalar_lea.vmem %s1, %s182
      %p184 = pneg %p84
      %p185 = pneg %p81
      %p186 = pneg %p110
      %p187 = pneg %p107
      %p188 = scmp.lt.s32.totalorder %s17, 1
      %s189 = scalar_select %p188, %s17, 1
      %s190 = smul.addr %s189, 4
      %s191 = smul.addr %s190, 8
      %s192 = scalar_lea.vmem %s2, %s191
      %s193 = sadd.s32 %s17, %s18
      %p194 = scmp.lt.s32.totalorder %s193, 0
      %s195 = scalar_select %p194, %s193, 0
      %s196 = smul.u32 8, %s195
      %p197 = scmp.lt.s32.totalorder %s196, 7
      %s198 = scalar_select %p197, %s196, 7
      %s199 = smul.addr %s198, 8
      %s200 = scalar_lea.vmem %s0, %s199
      %s201 = sadd.s32 %s17, %s18
      %p202 = scmp.lt.s32.totalorder %s201, 0
      %s203 = scalar_select %p202, %s201, 0
      %s204 = smul.u32 8, %s203
      %s205 = sadd.s32 %s17, %s18
      %p206 = scmp.lt.s32.totalorder %s205, 0
      %s207 = scalar_select %p206, %s205, 0
      %s208 = smul.u32 8, %s207
      %p209 = scmp.lt.s32.totalorder %s208, 7
      %s210 = scalar_select %p209, %s208, 7
      %s211 = smul.addr %s210, 8
      %s212 = scalar_lea.vmem %s1, %s211
      %s213 = sadd.s32 %s17, %s18
      %p214 = scmp.lt.s32.totalorder %s213, 0
      %s215 = scalar_select %p214, %s213, 0
      %s216 = smul.u32 8, %s215
      %p217 = scmp.lt.s32.totalorder %s17, 1
      %s218 = scalar_select %p217, %s17, 1
      %s219 = smul.addr %s218, 4
      %s220 = smul.addr %s219, 8
      %s221 = scalar_lea.vmem %s2, %s220
      %p222 = scmp.eq.s32.totalorder %s18, 0
      // Predicated region
      $region29: #{weighted_bce.1} parent=27 // pred_check
        %p223 = pneg %p222
      $region30: #{weighted_bce.1} parent=27 // pred_check_branch
        %225 = sbr.rel (%p223) target = $region32
      $region31: #{weighted_bce.1} parent=27 // pred_region
        %226 = vst [vmem:[%s221] sm:$0xff] 0.0
        %227 = vst [vmem:[%s221 + $0x8] sm:$0xff] 0.0
        %228 = vst [vmem:[%s221 + $0x10] sm:$0xff] 0.0
        %229 = vst [vmem:[%s221 + $0x18] sm:$0xff] 0.0
      $region32: #{weighted_bce.1} parent=27 // pred_fallthru
        _
      %s230 = sadd.s32 %s17, %s18
      %p231 = scmp.lt.s32.totalorder %s230, 1
      // Predicated region
      $region33: #{weighted_bce.1} parent=27 // pred_check
        %p232 = pneg %p231
      $region34: #{weighted_bce.1} parent=27 // pred_check_branch
        %234 = sbr.rel (%p232) target = $region36
      $region35: #{weighted_bce.1} parent=27 // pred_region
        %v235 = vld [vmem:[%s200] sm:$0xff]
        %v236 = vld [vmem:[%s200 + $0x8] sm:$0xff]
        %v237 = vld [vmem:[%s200 + $0x10] sm:$0xff]
        %v238 = vld [vmem:[%s200 + $0x18] sm:$0xff]
        %v239 = vld [vmem:[%s212] sm:$0xff]
        %v240 = vld [vmem:[%s212 + $0x8] sm:$0xff]
        %v241 = vld [vmem:[%s212 + $0x10] sm:$0xff]
        %v242 = vld [vmem:[%s212 + $0x18] sm:$0xff]
        %v243 = vlog2.pop %v235
        %v244 = vmul.f32 %v243, 0.6931472
        %v245 = vlog2.pop %v236
        %v246 = vmul.f32 %v245, 0.6931472
        %v247 = vlog2.pop %v237
        %v248 = vmul.f32 %v247, 0.6931472
        %v249 = vlog2.pop %v238
        %v250 = vmul.f32 %v249, 0.6931472
        %v251 = vmax.f32 %v244, -100.0
        %v252 = vmax.f32 %v246, -100.0
        %v253 = vmax.f32 %v248, -100.0
        %v254 = vmax.f32 %v250, -100.0
        %v255 = vsub.f32 1.0, %v235
        %v256 = vsub.f32 1.0, %v236
        %v257 = vsub.f32 1.0, %v237
        %v258 = vsub.f32 1.0, %v238
        %v259 = vlog2.pop %v255
        %v260 = vmul.f32 %v259, 0.6931472
        %v261 = vlog2.pop %v256
        %v262 = vmul.f32 %v261, 0.6931472
        %v263 = vlog2.pop %v257
        %v264 = vmul.f32 %v263, 0.6931472
        %v265 = vlog2.pop %v258
        %v266 = vmul.f32 %v265, 0.6931472
        %v267 = vmax.f32 %v260, -100.0
        %v268 = vmax.f32 %v262, -100.0
        %v269 = vmax.f32 %v264, -100.0
        %v270 = vmax.f32 %v266, -100.0
        %v271 = vmul.f32 %v239, %v251
        %v272 = vmul.f32 %v240, %v252
        %v273 = vmul.f32 %v241, %v253
        %v274 = vmul.f32 %v242, %v254
        %v275 = vsub.f32 1.0, %v239
        %v276 = vsub.f32 1.0, %v240
        %v277 = vsub.f32 1.0, %v241
        %v278 = vsub.f32 1.0, %v242
        %v279 = vmul.f32 %v275, %v267
        %v280 = vmul.f32 %v276, %v268
        %v281 = vmul.f32 %v277, %v269
        %v282 = vmul.f32 %v278, %v270
        %v283 = vadd.f32 %v271, %v279
        %v284 = vadd.f32 %v272, %v280
        %v285 = vadd.f32 %v273, %v281
        %v286 = vadd.f32 %v274, %v282
        %v287 = vsub.f32 0.0, %v283
        %v288 = vsub.f32 0.0, %v284
        %v289 = vsub.f32 0.0, %v285
        %v290 = vsub.f32 0.0, %v286
        %vm291 = vcmp.gt.f32.partialorder %v239, 0.5
        %vm292 = vcmp.gt.f32.partialorder %v240, 0.5
        %vm293 = vcmp.gt.f32.partialorder %v241, 0.5
        %vm294 = vcmp.gt.f32.partialorder %v242, 0.5
        %v295 = vsel %vm291, 1, 0
        %v296 = vsel %vm292, 1, 0
        %v297 = vsel %vm293, 1, 0
        %v298 = vsel %vm294, 1, 0
        %v299 = vcvt.s32.f32 %v295
        %v300 = vcvt.s32.f32 %v296
        %v301 = vcvt.s32.f32 %v297
        %v302 = vcvt.s32.f32 %v298
        %vm303 = vcmp.lt.f32.partialorder %v239, 0.5
        %vm304 = vcmp.lt.f32.partialorder %v240, 0.5
        %vm305 = vcmp.lt.f32.partialorder %v241, 0.5
        %vm306 = vcmp.lt.f32.partialorder %v242, 0.5
        %v307 = vsel %vm303, 1, 0
        %v308 = vsel %vm304, 1, 0
        %v309 = vsel %vm305, 1, 0
        %v310 = vsel %vm306, 1, 0
        %v311 = vcvt.s32.f32 %v307
        %v312 = vcvt.s32.f32 %v308
        %v313 = vcvt.s32.f32 %v309
        %v314 = vcvt.s32.f32 %v310
        %v315 = vmul.f32 %v299, %v287
        %v316 = vmul.f32 %v300, %v288
        %v317 = vmul.f32 %v301, %v289
        %v318 = vmul.f32 %v302, %v290
        %v319 = vadd.f32 %v315, %v316
        %v320 = vadd.f32 %v319, %v317
        %v321 = vadd.f32 %v320, %v318
        %v322 = vadd.f32 %v321, 0.0
        %v323 = vmul.f32 %v311, %v287
        %v324 = vmul.f32 %v312, %v288
        %v325 = vmul.f32 %v313, %v289
        %v326 = vmul.f32 %v314, %v290
        %v327 = vadd.f32 %v323, %v324
        %v328 = vadd.f32 %v327, %v325
        %v329 = vadd.f32 %v328, %v326
        %v330 = vadd.f32 %v329, 0.0
        %v331 = vadd.f32 %v299, %v300
        %v332 = vadd.f32 %v331, %v301
        %v333 = vadd.f32 %v332, %v302
        %v334 = vadd.f32 %v333, 0.0
        %v335 = vadd.f32 %v311, %v312
        %v336 = vadd.f32 %v335, %v313
        %v337 = vadd.f32 %v336, %v314
        %v338 = vadd.f32 %v337, 0.0
        %s339 = scalar_lea.vmem %s200, 32
        %v340 = vld [vmem:[%s339] sm:$0xff]
        %v341 = vld [vmem:[%s339 + $0x8] sm:$0xff]
        %v342 = vld [vmem:[%s339 + $0x10] sm:$0xff]
        %v343 = vld [vmem:[%s339 + $0x18] sm:$0xff]
        %s344 = scalar_lea.vmem %s212, 32
        %v345 = vld [vmem:[%s344] sm:$0xff]
        %v346 = vld [vmem:[%s344 + $0x8] sm:$0xff]
        %v347 = vld [vmem:[%s344 + $0x10] sm:$0xff]
        %v348 = vld [vmem:[%s344 + $0x18] sm:$0xff]
        %v349 = vlog2.pop %v340
        %v350 = vmul.f32 %v349, 0.6931472
        %v351 = vlog2.pop %v341
        %v352 = vmul.f32 %v351, 0.6931472
        %v353 = vlog2.pop %v342
        %v354 = vmul.f32 %v353, 0.6931472
        %v355 = vlog2.pop %v343
        %v356 = vmul.f32 %v355, 0.6931472
        %v357 = vmax.f32 %v350, -100.0
        %v358 = vmax.f32 %v352, -100.0
        %v359 = vmax.f32 %v354, -100.0
        %v360 = vmax.f32 %v356, -100.0
        %v361 = vsub.f32 1.0, %v340
        %v362 = vsub.f32 1.0, %v341
        %v363 = vsub.f32 1.0, %v342
        %v364 = vsub.f32 1.0, %v343
        %v365 = vlog2.pop %v361
        %v366 = vmul.f32 %v365, 0.6931472
        %v367 = vlog2.pop %v362
        %v368 = vmul.f32 %v367, 0.6931472
        %v369 = vlog2.pop %v363
        %v370 = vmul.f32 %v369, 0.6931472
        %v371 = vlog2.pop %v364
        %v372 = vmul.f32 %v371, 0.6931472
        %v373 = vmax.f32 %v366, -100.0
        %v374 = vmax.f32 %v368, -100.0
        %v375 = vmax.f32 %v370, -100.0
        %v376 = vmax.f32 %v372, -100.0
        %v377 = vmul.f32 %v345, %v357
        %v378 = vmul.f32 %v346, %v358
        %v379 = vmul.f32 %v347, %v359
        %v380 = vmul.f32 %v348, %v360
        %v381 = vsub.f32 1.0, %v345
        %v382 = vsub.f32 1.0, %v346
        %v383 = vsub.f32 1.0, %v347
        %v384 = vsub.f32 1.0, %v348
        %v385 = vmul.f32 %v381, %v373
        %v386 = vmul.f32 %v382, %v374
        %v387 = vmul.f32 %v383, %v375
        %v388 = vmul.f32 %v384, %v376
        %v389 = vadd.f32 %v377, %v385
        %v390 = vadd.f32 %v378, %v386
        %v391 = vadd.f32 %v379, %v387
        %v392 = vadd.f32 %v380, %v388
        %v393 = vsub.f32 0.0, %v389
        %v394 = vsub.f32 0.0, %v390
        %v395 = vsub.f32 0.0, %v391
        %v396 = vsub.f32 0.0, %v392
        %vm397 = vcmp.gt.f32.partialorder %v345, 0.5
        %vm398 = vcmp.gt.f32.partialorder %v346, 0.5
        %vm399 = vcmp.gt.f32.partialorder %v347, 0.5
        %vm400 = vcmp.gt.f32.partialorder %v348, 0.5
        %v401 = vsel %vm397, 1, 0
        %v402 = vsel %vm398, 1, 0
        %v403 = vsel %vm399, 1, 0
        %v404 = vsel %vm400, 1, 0
        %v405 = vcvt.s32.f32 %v401
        %v406 = vcvt.s32.f32 %v402
        %v407 = vcvt.s32.f32 %v403
        %v408 = vcvt.s32.f32 %v404
        %vm409 = vcmp.lt.f32.partialorder %v345, 0.5
        %vm410 = vcmp.lt.f32.partialorder %v346, 0.5
        %vm411 = vcmp.lt.f32.partialorder %v347, 0.5
        %vm412 = vcmp.lt.f32.partialorder %v348, 0.5
        %v413 = vsel %vm409, 1, 0
        %v414 = vsel %vm410, 1, 0
        %v415 = vsel %vm411, 1, 0
        %v416 = vsel %vm412, 1, 0
        %v417 = vcvt.s32.f32 %v413
        %v418 = vcvt.s32.f32 %v414
        %v419 = vcvt.s32.f32 %v415
        %v420 = vcvt.s32.f32 %v416
        %v421 = vmul.f32 %v405, %v393
        %v422 = vmul.f32 %v406, %v394
        %v423 = vmul.f32 %v407, %v395
        %v424 = vmul.f32 %v408, %v396
        %v425 = vadd.f32 %v421, %v422
        %v426 = vadd.f32 %v425, %v423
        %v427 = vadd.f32 %v426, %v424
        %v428 = vadd.f32 %v322, %v427
        %v429 = vmul.f32 %v417, %v393
        %v430 = vmul.f32 %v418, %v394
        %v431 = vmul.f32 %v419, %v395
        %v432 = vmul.f32 %v420, %v396
        %v433 = vadd.f32 %v429, %v430
        %v434 = vadd.f32 %v433, %v431
        %v435 = vadd.f32 %v434, %v432
        %v436 = vadd.f32 %v330, %v435
        %v437 = vadd.f32 %v405, %v406
        %v438 = vadd.f32 %v437, %v407
        %v439 = vadd.f32 %v438, %v408
        %v440 = vadd.f32 %v334, %v439
        %v441 = vadd.f32 %v417, %v418
        %v442 = vadd.f32 %v441, %v419
        %v443 = vadd.f32 %v442, %v420
        %v444 = vadd.f32 %v338, %v443
        %v445 = vld [vmem:[%s221] sm:$0xff]
        %v446 = vadd.f32 %v445, %v428
        %447 = vst [vmem:[%s221] sm:$0xff] %v446
        %s448 = scalar_lea.vmem %s221, 8
        %v449 = vld [vmem:[%s448] sm:$0xff]
        %v450 = vadd.f32 %v449, %v436
        %451 = vst [vmem:[%s448] sm:$0xff] %v450
        %s452 = scalar_lea.vmem %s221, 16
        %v453 = vld [vmem:[%s452] sm:$0xff]
        %v454 = vadd.f32 %v453, %v440
        %455 = vst [vmem:[%s452] sm:$0xff] %v454
        %s456 = scalar_lea.vmem %s221, 24
        %v457 = vld [vmem:[%s456] sm:$0xff]
        %v458 = vadd.f32 %v457, %v444
        %459 = vst [vmem:[%s456] sm:$0xff] %v458
      $region36: #{weighted_bce.1} parent=27 // pred_fallthru
        _
      %p460 = scmp.lt.s32.totalorder %s17, 1
      %s461 = scalar_select %p460, %s17, 1
      %s462 = smul.addr %s461, 4
      %s463 = smul.addr %s462, 8
      %s464 = scalar_lea.vmem %s2, %s463
      // Predicated region
      $region37: #{weighted_bce.1} parent=27 // pred_check
        %p465 = pneg %p107
      $region38: #{weighted_bce.1} parent=27 // pred_check_branch
        %467 = sbr.rel (%p465) target = $region40
      $region39: #{weighted_bce.1} parent=27 // pred_region
        _
      $region40: #{weighted_bce.1} parent=27 // pred_fallthru
        _
    $region28: #{weighted_bce.1} parent=5 // pred_fallthru
      _
    %p468 = scmp.le.s32.totalorder 2, %s8
    // Predicated region
    $region41: #{weighted_bce.1} parent=5 // pred_check
      %p469 = pneg %p468
    $region42: #{weighted_bce.1} parent=5 // pred_check_branch
      %471 = sbr.rel (%p469) target = $region44
    $region43: #{weighted_bce.1} parent=5 // pred_region
      %s472 = ssub.s32 %s8, 2
      // Predicated region
      $region45: #{weighted_bce.1} parent=43 // pred_check
        %p473 = pneg %p113
      $region46: #{weighted_bce.1} parent=43 // pred_check_branch
        %475 = sbr.rel (%p473) target = $region48
      $region47: #{weighted_bce.1} parent=43 // pred_region
        %p476 = scmp.lt.s32.totalorder %s19, 1
        %s477 = scalar_select %p476, %s19, 1
        %s478 = smul.addr %s477, 4
        %s479 = smul.addr %s478, 8
        %s480 = scalar_lea.vmem %s2, %s479
      $region48: #{weighted_bce.1} parent=43 // pred_fallthru
        _
    $region44: #{weighted_bce.1} parent=5 // pred_fallthru
      _
  $region6: #{weighted_bce.1} parent=0 // loop_footer
    %s12 = sadd.s32 1, %s8
  $region7: #{weighted_bce.1} parent=0 // loop_footer_branch
    %7 = sbr.rel target = $region3
  $region8: #{weighted_bce.1} parent=0 // loop_exit
    _

</llo_original>
